<compile_context>
chip_gen: v5e
topology: v5e:2x2
jax: 0.10.0
libtpu: 0.0.40
codegen_flags: <defaults>
</compile_context>

<pallas_src>
import functools

import jax
import jax.numpy as jnp
from jax.experimental import pallas as pl
from jax.experimental.pallas import tpu as pltpu


STATE_DIM = 11            # SpotEnv.state_dim
ACTION_DIM = 8            # SpotEnv.action_dim
HIDDEN_DIM = 128          # hidden_dim in the PyTorch script
PADDED_ACTION_DIM = 128   # lane-dense output slab width (full 128-lane vreg)
NEG_BIG = -1e30           # bias on padding logits -> exp underflows to exactly 0


def policy_net_kernel(x_ref, w1_ref, b1_ref, w2_ref, b2_ref, out_ref):
    # x: (TB, STATE_DIM) f32
    x = x_ref[...]

    # fc1 + ReLU  (MXU matmul, f32 accumulate)
    h = jnp.dot(x, w1_ref[...], preferred_element_type=jnp.float32) + b1_ref[...]
    h = jnp.maximum(h, 0.0)

    # fc2 into a lane-dense 128-wide slab; padding columns carry a -1e30 bias
    # so exp(logit - max) underflows to exactly 0 for them.
    logits = jnp.dot(h, w2_ref[...], preferred_element_type=jnp.float32) + b2_ref[...]

    # Softmax over dim=1 (action dim), numerically stabilized, exact divide.
    m = jnp.max(logits, axis=1, keepdims=True)
    e = jnp.exp(logits - m)
    denom = jnp.sum(e, axis=1, keepdims=True)
    out_ref[...] = (e / denom).astype(out_ref.dtype)


def _round_up(n, m):
    return (n + m - 1) // m * m


def pad_fc2_params(w2, b2):
    """Pad fc2 to a lane-dense 128-wide output slab. Call ONCE at init time."""
    w2p = jnp.zeros((HIDDEN_DIM, PADDED_ACTION_DIM), jnp.float32)
    w2p = w2p.at[:, :ACTION_DIM].set(w2.astype(jnp.float32))
    b2p = jnp.full((1, PADDED_ACTION_DIM), NEG_BIG, jnp.float32)
    b2p = b2p.at[:, :ACTION_DIM].set(b2.astype(jnp.float32).reshape(1, ACTION_DIM))
    return w2p, b2p


@functools.partial(jax.jit, static_argnames=("block_b",))
def policy_net_forward(x, w1, b1, w2_padded, b2_padded, *, block_b=2048):
    """x: (B, STATE_DIM) f32 -> (B, ACTION_DIM) softmax probabilities.

    w1: (STATE_DIM, HIDDEN_DIM), b1: (1, HIDDEN_DIM),
    w2_padded: (HIDDEN_DIM, 128) zero-padded, b2_padded: (1, 128) with -1e30
    in the padding columns (see pad_fc2_params).
    """
    B = x.shape[0]

    # Balanced batch tiling: at least ceil(B / block_b) tiles; use >= 2 tiles
    # once B is non-trivial so the "parallel" axis can shard across v7x's two
    # TensorCores and ragged batches don't pad up to a full block_b tile.
    n_tiles = max(pl.cdiv(B, block_b), 2 if B >= 64 else 1)
    TB = _round_up(pl.cdiv(B, n_tiles), 8)
    Bp = _round_up(B, TB)
    xp = x if Bp == B else jnp.pad(x, ((0, Bp - B), (0, 0)))
    grid = (Bp // TB,)

    # x / out blocks are lane-padded to 128-wide f32 in VMEM and double
    # buffered; only raise the scoped-VMEM limit when we'd exceed the v5e
    # default of 16 MiB (never at the default block_b=2048).
    blk_bytes = TB * 128 * 4
    est_vmem = 2 * 2 * blk_bytes + 2 * (HIDDEN_DIM + 2) * PADDED_ACTION_DIM * 4
    compiler_kwargs = dict(dimension_semantics=("parallel",))
    if est_vmem > 16 * 1024 * 1024:
        compiler_kwargs["vmem_limit_bytes"] = min(2 * est_vmem, 100 * 1024 * 1024)

    out_padded = pl.pallas_call(
        policy_net_kernel,
        out_shape=jax.ShapeDtypeStruct((Bp, PADDED_ACTION_DIM), jnp.float32),
        grid=grid,
        in_specs=[
            pl.BlockSpec((TB, STATE_DIM), lambda i: (i, 0)),
            # Constant index_maps: weights/biases stay VMEM-resident across steps.
            pl.BlockSpec((STATE_DIM, HIDDEN_DIM), lambda i: (0, 0)),
            pl.BlockSpec((1, HIDDEN_DIM), lambda i: (0, 0)),
            pl.BlockSpec((HIDDEN_DIM, PADDED_ACTION_DIM), lambda i: (0, 0)),
            pl.BlockSpec((1, PADDED_ACTION_DIM), lambda i: (0, 0)),
        ],
        out_specs=pl.BlockSpec((TB, PADDED_ACTION_DIM), lambda i: (i, 0)),
        compiler_params=pltpu.CompilerParams(**compiler_kwargs),
        cost_estimate=pl.CostEstimate(
            flops=2 * Bp * (STATE_DIM * HIDDEN_DIM + HIDDEN_DIM * PADDED_ACTION_DIM),
            transcendentals=Bp * PADDED_ACTION_DIM,
            bytes_accessed=4 * (Bp * STATE_DIM + Bp * PADDED_ACTION_DIM
                                + STATE_DIM * HIDDEN_DIM
                                + HIDDEN_DIM * PADDED_ACTION_DIM
                                + HIDDEN_DIM + PADDED_ACTION_DIM),
        ),
    )(xp, w1, b1, w2_padded, b2_padded)

    # TODO(synk): fuse the downstream consumer (categorical sample / chosen-action
    # log-prob, critic head) into the kernel so this slice/copy disappears and the
    # HBM writeback shrinks ~16x.
    return out_padded[:B, :ACTION_DIM]


def init_params(key):
    """Deterministic init matching PyTorch Linear shapes (stored transposed),
    with fc2 pre-padded to the lane-dense slab once, at init time."""
    k1, k2, k3, k4 = jax.random.split(key, 4)
    # PyTorch default: U(-1/sqrt(fan_in), 1/sqrt(fan_in))
    bound1 = 1.0 / (STATE_DIM ** 0.5)
    bound2 = 1.0 / (HIDDEN_DIM ** 0.5)
    w1 = jax.random.uniform(k1, (STATE_DIM, HIDDEN_DIM), jnp.float32,
                            minval=-bound1, maxval=bound1)
    b1 = jax.random.uniform(k2, (1, HIDDEN_DIM), jnp.float32,
                            minval=-bound1, maxval=bound1)
    w2 = jax.random.uniform(k3, (HIDDEN_DIM, ACTION_DIM), jnp.float32,
                            minval=-bound2, maxval=bound2)
    b2 = jax.random.uniform(k4, (1, ACTION_DIM), jnp.float32,
                            minval=-bound2, maxval=bound2)
    w2p, b2p = pad_fc2_params(w2, b2)
    return w1, b1, w2p, b2p


def reference_forward(x, w1, b1, w2_padded, b2_padded):
    h = jnp.maximum(x @ w1 + b1, 0.0)
    logits = h @ w2_padded[:, :ACTION_DIM] + b2_padded[:, :ACTION_DIM]
    return jax.nn.softmax(logits, axis=1)


if __name__ == "__main__":
    key = jax.random.PRNGKey(0)
    kx, kp, kx2 = jax.random.split(key, 3)
    w1, b1, w2p, b2p = init_params(kp)

    # Small per-env-step batch (single tile).
    batch = 8
    x = jax.random.normal(kx, (batch, STATE_DIM), jnp.float32)
    out = jax.block_until_ready(policy_net_forward(x, w1, b1, w2p, b2p))
    ref = reference_forward(x, w1, b1, w2p, b2p)
    assert out.shape == (batch, ACTION_DIM)
    assert jnp.allclose(jnp.sum(out, axis=1), 1.0, atol=1e-3)
    assert jnp.allclose(out, ref, atol=1e-3, rtol=1e-3)

    # Rollout-sized ragged batch: exercises the balanced 2-tile grid (2x304),
    # resident-weight index_maps, and the small batch-padding path.
    batch2 = 600
    x2 = jax.random.normal(kx2, (batch2, STATE_DIM), jnp.float32)
    out2 = jax.block_until_ready(policy_net_forward(x2, w1, b1, w2p, b2p))
    ref2 = reference_forward(x2, w1, b1, w2p, b2p)
    assert out2.shape == (batch2, ACTION_DIM)
    assert jnp.allclose(jnp.sum(out2, axis=1), 1.0, atol=1e-3)
    assert jnp.allclose(out2, ref2, atol=1e-3, rtol=1e-3)

    print("KERNEL_OK")
</pallas_src>

<mosaic_0001>
module attributes {stable_mosaic.version = 11 : i64} {
  func.func @policy_net_kernel(%arg0: i32, %arg1: memref<8x11xf32, #tpu.memory_space<vmem>>, %arg2: memref<11x128xf32, #tpu.memory_space<vmem>>, %arg3: memref<1x128xf32, #tpu.memory_space<vmem>>, %arg4: memref<128x128xf32, #tpu.memory_space<vmem>>, %arg5: memref<1x128xf32, #tpu.memory_space<vmem>>, %arg6: memref<8x128xf32, #tpu.memory_space<vmem>>) attributes {dimension_semantics = [#tpu.dimension_semantics<parallel>], iteration_bounds = array<i64: 1>, scalar_prefetch = 0 : i64, scratch_operands = 0 : i64, tpu.core_type = #tpu.core_type<tc>, window_params = [{transform_indices = @transform_0, window_bounds = array<i64: 8, 11>}, {pipeline_mode = #tpu.pipeline_mode<synchronous>, transform_indices = @transform_1, window_bounds = array<i64: 11, 128>}, {pipeline_mode = #tpu.pipeline_mode<synchronous>, transform_indices = @transform_2, window_bounds = array<i64: 1, 128>}, {pipeline_mode = #tpu.pipeline_mode<synchronous>, transform_indices = @transform_3, window_bounds = array<i64: 128, 128>}, {pipeline_mode = #tpu.pipeline_mode<synchronous>, transform_indices = @transform_4, window_bounds = array<i64: 1, 128>}, {transform_indices = @transform_5, window_bounds = array<i64: 8, 128>}]} {
    %c0 = arith.constant 0 : index
    %c0_0 = arith.constant 0 : index
    %0 = vector.load %arg1[%c0, %c0_0] : memref<8x11xf32, #tpu.memory_space<vmem>>, vector<8x11xf32>
    %c0_1 = arith.constant 0 : index
    %c0_2 = arith.constant 0 : index
    %1 = vector.load %arg2[%c0_1, %c0_2] : memref<11x128xf32, #tpu.memory_space<vmem>>, vector<11x128xf32>
    %cst = arith.constant dense<0.000000e+00> : vector<8x128xf32>
    %2 = tpu.matmul %0, %1, %cst {dimension_numbers = #tpu.dot_dimension_numbers<[1], [0], [0], [1], [0, 0, 1, 1], [], []>} : vector<8x11xf32>, vector<11x128xf32>, vector<8x128xf32> -> vector<8x128xf32>
    %c0_3 = arith.constant 0 : index
    %c0_4 = arith.constant 0 : index
    %3 = vector.load %arg3[%c0_3, %c0_4] : memref<1x128xf32, #tpu.memory_space<vmem>>, vector<1x128xf32>
    %4 = vector.broadcast %3 : vector<1x128xf32> to vector<8x128xf32>
    %5 = arith.addf %2, %4 : vector<8x128xf32>
    %cst_5 = arith.constant 0.000000e+00 : f32
    %6 = vector.broadcast %cst_5 : f32 to vector<8x128xf32>
    %7 = arith.maximumf %5, %6 : vector<8x128xf32>
    %c0_6 = arith.constant 0 : index
    %c0_7 = arith.constant 0 : index
    %8 = vector.load %arg4[%c0_6, %c0_7] : memref<128x128xf32, #tpu.memory_space<vmem>>, vector<128x128xf32>
    %cst_8 = arith.constant dense<0.000000e+00> : vector<8x128xf32>
    %9 = tpu.matmul %7, %8, %cst_8 {dimension_numbers = #tpu.dot_dimension_numbers<[1], [0], [0], [1], [0, 0, 1, 1], [], []>} : vector<8x128xf32>, vector<128x128xf32>, vector<8x128xf32> -> vector<8x128xf32>
    %c0_9 = arith.constant 0 : index
    %c0_10 = arith.constant 0 : index
    %10 = vector.load %arg5[%c0_9, %c0_10] : memref<1x128xf32, #tpu.memory_space<vmem>>, vector<1x128xf32>
    %11 = vector.broadcast %10 : vector<1x128xf32> to vector<8x128xf32>
    %12 = arith.addf %9, %11 : vector<8x128xf32>
    %cst_11 = arith.constant dense<0xFF800000> : vector<8xf32>
    %13 = vector.multi_reduction <maximumf>, %12, %cst_11 [1] : vector<8x128xf32> to vector<8xf32>
    %14 = vector.shape_cast %13 : vector<8xf32> to vector<8x1xf32>
    %15 = vector.broadcast %14 : vector<8x1xf32> to vector<8x128xf32>
    %16 = arith.subf %12, %15 : vector<8x128xf32>
    %17 = math.exp %16 : vector<8x128xf32>
    %cst_12 = arith.constant dense<0.000000e+00> : vector<8xf32>
    %18 = vector.multi_reduction <add>, %17, %cst_12 [1] : vector<8x128xf32> to vector<8xf32>
    %19 = vector.shape_cast %18 : vector<8xf32> to vector<8x1xf32>
    %20 = vector.broadcast %19 : vector<8x1xf32> to vector<8x128xf32>
    %21 = arith.divf %17, %20 : vector<8x128xf32>
    %c0_13 = arith.constant 0 : index
    %c0_14 = arith.constant 0 : index
    %22 = vector.load %arg6[%c0_13, %c0_14] : memref<8x128xf32, #tpu.memory_space<vmem>>, vector<8x128xf32>
    tpu.vector_store %arg6[%c0_13, %c0_14], %21 {strides = array<i32>} : memref<8x128xf32, #tpu.memory_space<vmem>>, vector<8x128xf32>,
    return
  }
  func.func @transform_0(%arg0: i32) -> (i32, i32) {
    %c0_i32 = arith.constant 0 : i32
    %c0_i32_0 = arith.constant 0 : i32
    return %arg0, %c0_i32 : i32, i32
  }
  func.func @transform_1(%arg0: i32) -> (i32, i32) {
    %c0_i32 = arith.constant 0 : i32
    %c0_i32_0 = arith.constant 0 : i32
    %c0_i32_1 = arith.constant 0 : i32
    return %c0_i32, %c0_i32_0 : i32, i32
  }
  func.func @transform_2(%arg0: i32) -> (i32, i32) {
    %c0_i32 = arith.constant 0 : i32
    %c0_i32_0 = arith.constant 0 : i32
    %c0_i32_1 = arith.constant 0 : i32
    return %c0_i32, %c0_i32_0 : i32, i32
  }
  func.func @transform_3(%arg0: i32) -> (i32, i32) {
    %c0_i32 = arith.constant 0 : i32
    %c0_i32_0 = arith.constant 0 : i32
    %c0_i32_1 = arith.constant 0 : i32
    return %c0_i32, %c0_i32_0 : i32, i32
  }
  func.func @transform_4(%arg0: i32) -> (i32, i32) {
    %c0_i32 = arith.constant 0 : i32
    %c0_i32_0 = arith.constant 0 : i32
    %c0_i32_1 = arith.constant 0 : i32
    return %c0_i32, %c0_i32_0 : i32, i32
  }
  func.func @transform_5(%arg0: i32) -> (i32, i32) {
    %c0_i32 = arith.constant 0 : i32
    %c0_i32_0 = arith.constant 0 : i32
    return %arg0, %c0_i32 : i32, i32
  }
}

</mosaic_0001>

<llo_original>
// kernel: policy_net_forward.1
$region0: #{policy_net_forward.1}
  #allocation0 [shape = 'u32[]', space=smem, size = 0x4, offset = 0x4, fixed_abs, tag = 'smem constant byte address 0x4 - core index']
  #allocation1 [shape = 'u32[72,128]{1,0:T(1,128)}', space=vmem, size = 0x9000, scoped, tag = 'internal scratch']
  %s0 = inlined_call_operand.hbm [shape: f32[8,11], index: 0, kind: input, shape index: {}]
  %s1 = inlined_call_operand.hbm [shape: f32[11,128], index: 1, kind: input, shape index: {}]
  %s2 = inlined_call_operand.vmem [shape: f32[1,128], index: 2, kind: input, shape index: {}]
  %s3 = inlined_call_operand.hbm [shape: f32[128,128], index: 3, kind: input, shape index: {}]
  %s4 = inlined_call_operand.vmem [shape: f32[1,128], index: 4, kind: input, shape index: {}]
  %s5 = inlined_call_operand.hbm [shape: f32[8,128], index: 5, kind: output, shape index: {}]
  %s6 = sld [smem:[#allocation0]]
  $region42: #{policy_net_forward.1} parent=0
    _
  %s8 = ssub.s32 1, %s6
  %s9 = scalar_select 0, %s8, %s6
  $region1: #{policy_net_forward.1} parent=0
    #allocation2 [shape = 'u8[4096]{0}', space=vmem, size = 0x1000, scoped, tag = 'input window, operand 0, single buffered']
    #allocation3 [shape = 's32[1]{0}', space=sflag, size = 0x4, scoped, tag = 'scoped memory for policy_net_forward.1']
    #allocation4 [shape = 's32[1]{0}', space=sflag, size = 0x4, scoped, tag = 'scoped memory for policy_net_forward.1']
    #allocation5 [shape = 'u8[8192]{0}', space=vmem, size = 0x2000, scoped, tag = 'input window, operand 1, single buffered']
    #allocation6 [shape = 's32[1]{0}', space=sflag, size = 0x4, scoped, tag = 'scoped memory for policy_net_forward.1']
    #allocation7 [shape = 'u8[65536]{0}', space=vmem, size = 0x10000, scoped, tag = 'input window, operand 3, single buffered']
    #allocation8 [shape = 'u8[4096]{0}', space=vmem, size = 0x1000, scoped, tag = 'output window, operand 0, single buffered']
    %10 = vsyncpa [#allocation3], 0
    %11 = vsyncpa [#allocation6], 0
    %12 = vsyncpa [#allocation4], 0
    // Predicated region
    $region2: #{policy_net_forward.1} parent=1 // pred_check
      _
    $region3: #{policy_net_forward.1} parent=1 // pred_check_branch
      %14 = sbr.rel (0) target = $region5
    $region4: #{policy_net_forward.1} parent=1 // pred_region
      %16 = vsyncadd [#allocation3], 0
      %s18 = sshll.u32 %s0, 4
      %s19 = int_to_ptr.hbm [resolvable:$true] %s18
      %s20 = sshll.u32 [#allocation2], 4
      %s21 = int_to_ptr.vmem [resolvable:$true] %s20
      %23 = dma.hbm_to_vmem [thread:$0]  %s19, 128, %s21, [#allocation3]
    $region5: #{policy_net_forward.1} parent=1 // pred_fallthru
      _
    // Predicated region
    $region6: #{policy_net_forward.1} parent=1 // pred_check
      _
    $region7: #{policy_net_forward.1} parent=1 // pred_check_branch
      %25 = sbr.rel (0) target = $region9
    $region8: #{policy_net_forward.1} parent=1 // pred_region
      %27 = vsyncadd [#allocation6], 0
      %s28 = sshll.u32 %s1, 4
      %s29 = int_to_ptr.hbm [resolvable:$true] %s28
      %s30 = sshll.u32 [#allocation5], 4
      %s31 = int_to_ptr.vmem [resolvable:$true] %s30
      %36 = dma.hbm_to_vmem [thread:$0]  %s29, 256, %s31, [#allocation6], 128, 128, 8
    $region9: #{policy_net_forward.1} parent=1 // pred_fallthru
      _
    // Predicated region
    $region10: #{policy_net_forward.1} parent=1 // pred_check
      _
    $region11: #{policy_net_forward.1} parent=1 // pred_check_branch
      %38 = sbr.rel (0) target = $region13
    $region12: #{policy_net_forward.1} parent=1 // pred_region
      _
    $region13: #{policy_net_forward.1} parent=1 // pred_fallthru
      _
    // Predicated region
    $region14: #{policy_net_forward.1} parent=1 // pred_check
      _
    $region15: #{policy_net_forward.1} parent=1 // pred_check_branch
      %40 = sbr.rel (0) target = $region17
    $region16: #{policy_net_forward.1} parent=1 // pred_region
      %42 = vsyncadd [#allocation6], 0
      %s43 = sshll.u32 %s3, 4
      %s44 = int_to_ptr.hbm [resolvable:$true] %s43
      %s45 = sshll.u32 [#allocation7], 4
      %s46 = int_to_ptr.vmem [resolvable:$true] %s45
      %51 = dma.hbm_to_vmem [thread:$0]  %s44, 2048, %s46, [#allocation6], 128, 128, 8
    $region17: #{policy_net_forward.1} parent=1 // pred_fallthru
      _
    // Predicated region
    $region18: #{policy_net_forward.1} parent=1 // pred_check
      _
    $region19: #{policy_net_forward.1} parent=1 // pred_check_branch
      %53 = sbr.rel (0) target = $region21
    $region20: #{policy_net_forward.1} parent=1 // pred_region
      _
    $region21: #{policy_net_forward.1} parent=1 // pred_fallthru
      _
    // Predicated region
    $region22: #{policy_net_forward.1} parent=1 // pred_check
      _
    $region23: #{policy_net_forward.1} parent=1 // pred_check_branch
      %55 = sbr.rel (0) target = $region25
    $region24: #{policy_net_forward.1} parent=1 // pred_region
      %57 = dma.done [#allocation3], 128
    $region25: #{policy_net_forward.1} parent=1 // pred_fallthru
      _
    // Predicated region
    $region26: #{policy_net_forward.1} parent=1 // pred_check
      _
    $region27: #{policy_net_forward.1} parent=1 // pred_check_branch
      %59 = sbr.rel (0) target = $region29
    $region28: #{policy_net_forward.1} parent=1 // pred_region
      %61 = dma.done [#allocation6], 256
    $region29: #{policy_net_forward.1} parent=1 // pred_fallthru
      _
    // Predicated region
    $region30: #{policy_net_forward.1} parent=1 // pred_check
      _
    $region31: #{policy_net_forward.1} parent=1 // pred_check_branch
      %63 = sbr.rel (0) target = $region33
    $region32: #{policy_net_forward.1} parent=1 // pred_region
      %65 = dma.done [#allocation6], 2048
    $region33: #{policy_net_forward.1} parent=1 // pred_fallthru
      _
    %v66 = vld [vmem:[#allocation2] sm:$0xff]
    %v67 = vld [vmem:[#allocation5] sm:$0xff]
    %v68 = vld [vmem:[#allocation5 + $0x8] sm:$0x7]
    %v69 = vld [vmem:[%s2] sm:$0x1]
    %v71 = vperm.slane %v69, 0
    %vm73 = vcmask 89088
    %v75 = vsel %vm73, %v66, 0
    %vm77 = vcmask 1042432
    %v79 = vsel %vm77, %v68, 0
    %81 = vmatpush.msra.mxu0 0.0
    %82 = vmatpush.msra.mxu0 0.0
    %83 = vmatpush.msra.mxu0 0.0
    %84 = vmatpush.msra.mxu0 0.0
    %85 = vmatpush.msra.mxu0 0.0
    %86 = vmatpush.msra.mxu0 0.0
    %87 = vmatpush.msra.mxu0 0.0
    %88 = vmatpush.msra.mxu0 0.0
    %89 = vmatpush.msra.mxu0 0.0
    %90 = vmatpush.msra.mxu0 0.0
    %91 = vmatpush.msra.mxu0 0.0
    %92 = vmatpush.msra.mxu0 0.0
    %93 = vmatpush.msra.mxu0 0.0
    %94 = vmatpush.msra.mxu0 0.0
    %95 = vmatpush.msra.mxu0 %v79
    %96 = vmatpush.msra.mxu0 %v67
    %97 = vmatmul.f32.gmra.mxu0 %v75
    %v98 = vpop.f32.mrf.mxu0
    %v99 = vadd.f32 %v71, %v98
    %100 = vdwg.mxu0
    %v101 = vmax.f32 %v99, 0.0
    %v102 = vld [vmem:[#allocation7] sm:$0xff]
    %v103 = vld [vmem:[#allocation7 + $0x8] sm:$0xff]
    %v104 = vld [vmem:[#allocation7 + $0x10] sm:$0xff]
    %v105 = vld [vmem:[#allocation7 + $0x18] sm:$0xff]
    %v106 = vld [vmem:[#allocation7 + $0x20] sm:$0xff]
    %v107 = vld [vmem:[#allocation7 + $0x28] sm:$0xff]
    %v108 = vld [vmem:[#allocation7 + $0x30] sm:$0xff]
    %v109 = vld [vmem:[#allocation7 + $0x38] sm:$0xff]
    %v110 = vld [vmem:[#allocation7 + $0x40] sm:$0xff]
    %v111 = vld [vmem:[#allocation7 + $0x48] sm:$0xff]
    %v112 = vld [vmem:[#allocation7 + $0x50] sm:$0xff]
    %v113 = vld [vmem:[#allocation7 + $0x58] sm:$0xff]
    %v114 = vld [vmem:[#allocation7 + $0x60] sm:$0xff]
    %v115 = vld [vmem:[#allocation7 + $0x68] sm:$0xff]
    %v116 = vld [vmem:[#allocation7 + $0x70] sm:$0xff]
    %v117 = vld [vmem:[#allocation7 + $0x78] sm:$0xff]
    %v118 = vld [vmem:[%s4] sm:$0x1]
    %v120 = vperm.slane %v118, 0
    %122 = vmatpush.msra.mxu0 %v117
    %123 = vmatpush.msra.mxu0 %v116
    %124 = vmatpush.msra.mxu0 %v115
    %125 = vmatpush.msra.mxu0 %v114
    %126 = vmatpush.msra.mxu0 %v113
    %127 = vmatpush.msra.mxu0 %v112
    %128 = vmatpush.msra.mxu0 %v111
    %129 = vmatpush.msra.mxu0 %v110
    %130 = vmatpush.msra.mxu0 %v109
    %131 = vmatpush.msra.mxu0 %v108
    %132 = vmatpush.msra.mxu0 %v107
    %133 = vmatpush.msra.mxu0 %v106
    %134 = vmatpush.msra.mxu0 %v105
    %135 = vmatpush.msra.mxu0 %v104
    %136 = vmatpush.msra.mxu0 %v103
    %137 = vmatpush.msra.mxu0 %v102
    %138 = vmatmul.f32.gmra.mxu0 %v101
    %v139 = vpop.f32.mrf.mxu0
    %v140 = vadd.f32 %v120, %v139
    %141 = vdwg.mxu0
    %142 = vmax.xlane.f32.xlu0 %v140
    %v143 = vpop.xlane.xlu0 %142
    %v144 = vsub.f32 %v140, %v143
    %v145 = vmul.f32 %v144, 1.442695
    %v146 = vpow.pop %v145
    %147 = vadd.xlane.f32.xlu0 %v146
    %v148 = vpop.xlane.xlu0 %147
    %v149 = vrcp.pop %v148
    %v150 = vmul.f32 %v148, %v149
    %v151 = vsub.f32 1.0, %v150
    %v152 = vmul.f32 %v149, %v151
    %v153 = vadd.f32 %v149, %v152
    %vm154 = vweird.f32 %v148
    %vm155 = vweird.f32 %v149
    %vm156 = vmor %vm154, %vm155
    %v157 = vsel %vm156, %v149, %v153
    %v158 = vand.u32 2147483647, %v148
    %vm159 = vcmp.eq.f32.partialorder %v158, 8.507059e+37
    %v160 = vand.u32 %v148, 2147483648
    %v161 = vor.u32 1.1754944e-38, %v160
    %v162 = vsel %vm159, %v161, %v157
    %v163 = vmul.f32 %v146, %v162
    %164 = vst [vmem:[#allocation8] sm:$0xff] %v163
    // Predicated region
    $region34: #{policy_net_forward.1} parent=1 // pred_check
      _
    $region35: #{policy_net_forward.1} parent=1 // pred_check_branch
      %166 = sbr.rel (0) target = $region37
    $region36: #{policy_net_forward.1} parent=1 // pred_region
      %168 = vsyncadd [#allocation4], 0
      %s170 = sshll.u32 [#allocation8], 4
      %s171 = int_to_ptr.vmem [resolvable:$true] %s170
      %s172 = sshll.u32 %s5, 4
      %s173 = int_to_ptr.hbm [resolvable:$true] %s172
      %175 = dma.vmem_to_hbm [thread:$0]  %s171, 128, %s173, [#allocation4]
    $region37: #{policy_net_forward.1} parent=1 // pred_fallthru
      _
    // Predicated region
    $region38: #{policy_net_forward.1} parent=1 // pred_check
      _
    $region39: #{policy_net_forward.1} parent=1 // pred_check_branch
      %177 = sbr.rel (0) target = $region41
    $region40: #{policy_net_forward.1} parent=1 // pred_region
      %179 = dma.done [#allocation4], 128
    $region41: #{policy_net_forward.1} parent=1 // pred_fallthru
      _
    %180 = vsyncpa [#allocation3], 1
    %181 = vsyncpa [#allocation6], 1
    %182 = vsyncpa [#allocation4], 1

</llo_original>
